<compile_context>
chip_gen: v7x
topology: tpu7x:2x2x1
jax: 0.10.0
libtpu: 0.0.40
codegen_flags: <defaults>
</compile_context>

<pallas_src>
import functools

import jax
import jax.numpy as jnp
from jax.experimental import pallas as pl
from jax.experimental.pallas import tpu as pltpu


# ---------------------------------------------------------------------------
# fused affine_grid + grid_sample (bilinear, zeros padding, align_corners=True)
#
# Each grid step handles a tile_n slab of images and a pt slab of output
# pixels (flattened p = h*W + w).
# ---------------------------------------------------------------------------
def _sampler_kernel(theta_ref, coord_ref, img_ref, out_ref, *, H, W):
    f32 = jnp.float32

    # normalized output coordinates for this P-block (precomputed in wrapper)
    x_n = coord_ref[0:1, :]                        # (1, pt)
    y_n = coord_ref[1:2, :]                        # (1, pt)

    th = theta_ref[...]                            # (tn, 6) = [t00 t01 t02 t10 t11 t12]

    # affine_grid: gx = t00*x + t01*y + t02 ; gy = t10*x + t11*y + t12
    gx = th[:, 0:1] * x_n + th[:, 1:2] * y_n + th[:, 2:3]      # (tn, pt)
    gy = th[:, 3:4] * x_n + th[:, 4:5] * y_n + th[:, 5:6]      # (tn, pt)

    # grid_sample unnormalize (align_corners=True)
    ix = (gx + 1.0) * (0.5 * (W - 1))              # sample column, (tn, pt)
    iy = (gy + 1.0) * (0.5 * (H - 1))              # sample row,    (tn, pt)

    # Bilinear "tent" weights against every input column / row.  Built in f32
    # on the VPU (portable to v5e which has no bf16 VALU); taps outside
    # [0, W-1] / [0, H-1] get zero weight => padding_mode='zeros'.
    w_in = jax.lax.broadcasted_iota(jnp.int32, (1, W, 1), 1).astype(f32)
    h_in = jax.lax.broadcasted_iota(jnp.int32, (1, H, 1), 1).astype(f32)
    wx = jnp.maximum(0.0, 1.0 - jnp.abs(ix[:, None, :] - w_in))    # (tn, W, pt)
    wy = jnp.maximum(0.0, 1.0 - jnp.abs(iy[:, None, :] - h_in))    # (tn, H, pt)

    img = img_ref[...]                             # (tn, H, W) bf16

    # T[n,h,p] = sum_w img[n,h,w] * wx[n,w,p] : batched bf16 MXU matmul,
    # f32 accumulation.
    t = jax.lax.dot_general(
        img, wx.astype(jnp.bfloat16),
        dimension_numbers=(((2,), (1,)), ((0,), (0,))),
        preferred_element_type=f32)                # (tn, H, pt) f32

    # out[n,p] = sum_h wy[n,h,p] * T[n,h,p]
    out_ref[...] = jnp.sum(wy * t, axis=1).astype(out_ref.dtype)   # (tn, pt)


def _pick_p_tile(P, tile_n, H, W, budget_bytes=8 * 1024 * 1024):
    """Largest output-pixel tile that (a) is a multiple of 128 (lane-dense
    stores), (b) divides P, and (c) keeps the wx/wy/t intermediates under
    `budget_bytes` so the per-step working set fits VMEM even on v7x (64 MiB
    physical, 32 MiB scoped default)."""
    per_p_bytes = 4 * tile_n * (W + 2 * H)         # wx + wy + t, f32
    candidates = [d for d in range(128, P + 1, 128) if P % d == 0]
    if not candidates:
        # P not a multiple of 128: single block (masked stores).  Correct but
        # slower; prefer H*W that is a multiple of 128.
        return P
    fitting = [d for d in candidates if d * per_p_bytes <= budget_bytes]
    return max(fitting) if fitting else min(candidates)


def spatial_sample(theta, images):
    """theta (N, 2, 3), images (N, H, W) -> bilinearly resampled (N, H, W).

    Equivalent to F.grid_sample(x.reshape(N,1,H,W),
    F.affine_grid(theta, (N,1,H,W), align_corners=True),
    mode='bilinear', padding_mode='zeros', align_corners=True).
    """
    N, H, W = images.shape
    assert H > 1 and W > 1, "degenerate H==1 or W==1 not supported (align_corners)"
    P = H * W

    tile_n = 8                                     # sublane quantum
    N_pad = ((N + tile_n - 1) // tile_n) * tile_n  # pad N so blocks of 8 tile it

    theta6 = theta.reshape(N, 6).astype(jnp.float32)
    # bf16 image operand: native MXU rate on every generation + half the
    # DMA/VMEM for the largest input.  Accumulation stays f32 in the kernel.
    imgs = images.astype(jnp.bfloat16)
    if N_pad != N:
        theta6 = jnp.pad(theta6, ((0, N_pad - N), (0, 0)))
        imgs = jnp.pad(imgs, ((0, N_pad - N), (0, 0), (0, 0)))

    # normalized output coordinates, computed once (align_corners=True):
    #   x = 2*w/(W-1) - 1, y = 2*h/(H-1) - 1, flattened index p = h*W + w
    p = jnp.arange(P, dtype=jnp.int32)
    x_n = 2.0 * (p % W).astype(jnp.float32) / (W - 1) - 1.0
    y_n = 2.0 * (p // W).astype(jnp.float32) / (H - 1) - 1.0
    coords = jnp.stack([x_n, y_n], axis=0)         # (2, P) f32

    pt = _pick_p_tile(P, tile_n, H, W)
    grid = (N_pad // tile_n, P // pt)

    out_flat = pl.pallas_call(
        functools.partial(_sampler_kernel, H=H, W=W),
        out_shape=jax.ShapeDtypeStruct((N_pad, P), jnp.float32),
        grid=grid,
        in_specs=[
            pl.BlockSpec((tile_n, 6), lambda i, j: (i, 0)),       # theta
            pl.BlockSpec((2, pt), lambda i, j: (0, j)),           # coords
            # NOTE: for W < 128 this block is lane-sparse (each (8, W) row
            # pads to (8, 128)); the overhead disappears once W >= 128.
            pl.BlockSpec((tile_n, H, W), lambda i, j: (i, 0, 0)),  # images
        ],
        out_specs=pl.BlockSpec((tile_n, pt), lambda i, j: (i, j)),
        compiler_params=pltpu.CompilerParams(
            dimension_semantics=("parallel", "parallel"),
            vmem_limit_bytes=32 * 1024 * 1024),
    )(theta6, coords, imgs)
    return out_flat[:N].reshape(N, H, W)


# ---------------------------------------------------------------------------
# module wrapper (parameter setup / reshapes are plain-JAX glue)
# ---------------------------------------------------------------------------
class SpatialLinearTransformer:
    def __init__(self, i, num_channels, only_translations=False):
        self.only_translations = only_translations
        self.num_channels = num_channels
        # exactly like the PyTorch __init__: zero weight, identity-affine bias
        self.weight = jnp.zeros((num_channels * 2 * 3, i), jnp.float32)
        self.bias = jnp.tile(
            jnp.array([1, 0, 0, 0, 1, 0], jnp.float32), num_channels)

    def __call__(self, x):
        param_features, input_to_transform = x
        B, C, H, W = input_to_transform.shape
        assert C == self.num_channels
        # Locator Linear: tiny (B x I x 6C) GEMM.  Per the perf review this is
        # left to XLA -- a dedicated pallas_call only adds launch overhead and
        # an HBM round-trip for theta.
        theta_flat = (param_features.astype(jnp.float32) @ self.weight.T
                      + self.bias)                                 # (B, 6C)
        theta = theta_flat.reshape(-1, 2, 3)                       # (B*C, 2, 3)
        if self.only_translations:
            ident = jnp.broadcast_to(
                jnp.array([[1.0, 0.0], [0.0, 1.0]], jnp.float32),
                (theta.shape[0], 2, 2))
            theta = theta.at[:, :, :2].set(ident)
        imgs = input_to_transform.reshape(-1, H, W)
        out = spatial_sample(theta, imgs)                          # (B*C, H, W)
        return out.reshape(-1, C, H, W)


if __name__ == "__main__":
    key = jax.random.PRNGKey(0)
    B, C, H, W, I = 2, 4, 16, 16, 32
    k1, k2 = jax.random.split(key)
    param_features = jax.random.normal(k1, (B, I), jnp.float32)
    images = jax.random.normal(k2, (B, C, H, W), jnp.float32)

    mod = SpatialLinearTransformer(I, C)
    out = jax.block_until_ready(mod((param_features, images)))
    assert out.shape == (B, C, H, W)

    # With the module's init (zero weight, identity-affine bias) the transform
    # is the identity, so grid_sample(align_corners=True) must return the
    # input.  The image operand is carried in bf16 for the MXU (perf review),
    # so the tolerance is bf16-level rather than the original 1e-5.
    err = float(jnp.max(jnp.abs(out - images)))
    assert jnp.allclose(out, images, atol=3e-2), err

    # Sampling-kernel sanity check: translate by exactly +2 pixels in x
    # => output column w equals input column w+2, zeros at the right edge.
    N, shift_px = B * C, 2
    theta_t = jnp.tile(
        jnp.array([[1.0, 0.0, 2.0 * shift_px / (W - 1)],
                   [0.0, 1.0, 0.0]], jnp.float32)[None], (N, 1, 1))
    shifted = jax.block_until_ready(
        spatial_sample(theta_t, images.reshape(N, H, W)))
    expect = jnp.concatenate(
        [images.reshape(N, H, W)[:, :, shift_px:],
         jnp.zeros((N, H, shift_px), jnp.float32)], axis=-1)
    err2 = float(jnp.max(jnp.abs(shifted - expect)))
    assert jnp.allclose(shifted, expect, atol=3e-2), err2

    print("KERNEL_OK")
</pallas_src>

<mosaic_0001>
module attributes {stable_mosaic.version = 11 : i64} {
  func.func @_sampler_kernel(%arg0: i32, %arg1: i32, %arg2: memref<8x6xf32, #tpu.memory_space<vmem>>, %arg3: memref<2x256xf32, #tpu.memory_space<vmem>>, %arg4: memref<8x16x16xbf16, #tpu.memory_space<vmem>>, %arg5: memref<8x256xf32, #tpu.memory_space<vmem>>) attributes {dimension_semantics = [#tpu.dimension_semantics<parallel>, #tpu.dimension_semantics<parallel>], iteration_bounds = array<i64: 1, 1>, scalar_prefetch = 0 : i64, scratch_operands = 0 : i64, tpu.core_type = #tpu.core_type<tc>, window_params = [{transform_indices = @transform_0, window_bounds = array<i64: 8, 6>}, {transform_indices = @transform_1, window_bounds = array<i64: 2, 256>}, {transform_indices = @transform_2, window_bounds = array<i64: 8, 16, 16>}, {transform_indices = @transform_3, window_bounds = array<i64: 8, 256>}]} {
    %c0 = arith.constant 0 : index
    %c0_0 = arith.constant 0 : index
    %0 = vector.load %arg3[%c0, %c0_0] : memref<2x256xf32, #tpu.memory_space<vmem>>, vector<1x256xf32>
    %c1 = arith.constant 1 : index
    %c0_1 = arith.constant 0 : index
    %1 = vector.load %arg3[%c1, %c0_1] : memref<2x256xf32, #tpu.memory_space<vmem>>, vector<1x256xf32>
    %c0_2 = arith.constant 0 : index
    %c0_3 = arith.constant 0 : index
    %2 = vector.load %arg2[%c0_2, %c0_3] : memref<8x6xf32, #tpu.memory_space<vmem>>, vector<8x6xf32>
    %3 = vector.extract_strided_slice %2 {offsets = [0, 0], sizes = [8, 1], strides = [1, 1]} : vector<8x6xf32> to vector<8x1xf32>
    %4 = vector.broadcast %3 : vector<8x1xf32> to vector<8x256xf32>
    %5 = vector.broadcast %0 : vector<1x256xf32> to vector<8x256xf32>
    %6 = arith.mulf %4, %5 : vector<8x256xf32>
    %7 = vector.extract_strided_slice %2 {offsets = [0, 1], sizes = [8, 1], strides = [1, 1]} : vector<8x6xf32> to vector<8x1xf32>
    %8 = vector.broadcast %7 : vector<8x1xf32> to vector<8x256xf32>
    %9 = vector.broadcast %1 : vector<1x256xf32> to vector<8x256xf32>
    %10 = arith.mulf %8, %9 : vector<8x256xf32>
    %11 = arith.addf %6, %10 : vector<8x256xf32>
    %12 = vector.extract_strided_slice %2 {offsets = [0, 2], sizes = [8, 1], strides = [1, 1]} : vector<8x6xf32> to vector<8x1xf32>
    %13 = vector.broadcast %12 : vector<8x1xf32> to vector<8x256xf32>
    %14 = arith.addf %11, %13 : vector<8x256xf32>
    %15 = vector.extract_strided_slice %2 {offsets = [0, 3], sizes = [8, 1], strides = [1, 1]} : vector<8x6xf32> to vector<8x1xf32>
    %16 = vector.broadcast %15 : vector<8x1xf32> to vector<8x256xf32>
    %17 = vector.broadcast %0 : vector<1x256xf32> to vector<8x256xf32>
    %18 = arith.mulf %16, %17 : vector<8x256xf32>
    %19 = vector.extract_strided_slice %2 {offsets = [0, 4], sizes = [8, 1], strides = [1, 1]} : vector<8x6xf32> to vector<8x1xf32>
    %20 = vector.broadcast %19 : vector<8x1xf32> to vector<8x256xf32>
    %21 = vector.broadcast %1 : vector<1x256xf32> to vector<8x256xf32>
    %22 = arith.mulf %20, %21 : vector<8x256xf32>
    %23 = arith.addf %18, %22 : vector<8x256xf32>
    %24 = vector.extract_strided_slice %2 {offsets = [0, 5], sizes = [8, 1], strides = [1, 1]} : vector<8x6xf32> to vector<8x1xf32>
    %25 = vector.broadcast %24 : vector<8x1xf32> to vector<8x256xf32>
    %26 = arith.addf %23, %25 : vector<8x256xf32>
    %cst = arith.constant 1.000000e+00 : f32
    %27 = vector.broadcast %cst : f32 to vector<8x256xf32>
    %28 = arith.addf %14, %27 : vector<8x256xf32>
    %cst_4 = arith.constant 7.500000e+00 : f32
    %29 = vector.broadcast %cst_4 : f32 to vector<8x256xf32>
    %30 = arith.mulf %28, %29 : vector<8x256xf32>
    %cst_5 = arith.constant 1.000000e+00 : f32
    %31 = vector.broadcast %cst_5 : f32 to vector<8x256xf32>
    %32 = arith.addf %26, %31 : vector<8x256xf32>
    %cst_6 = arith.constant 7.500000e+00 : f32
    %33 = vector.broadcast %cst_6 : f32 to vector<8x256xf32>
    %34 = arith.mulf %32, %33 : vector<8x256xf32>
    %35 = tpu.iota {dimensions = array<i32: 1>} : vector<1x16x1xi32>
    %36 = arith.sitofp %35 : vector<1x16x1xi32> to vector<1x16x1xf32>
    %37 = tpu.iota {dimensions = array<i32: 1>} : vector<1x16x1xi32>
    %38 = arith.sitofp %37 : vector<1x16x1xi32> to vector<1x16x1xf32>
    %39 = vector.shape_cast %30 : vector<8x256xf32> to vector<8x1x256xf32>
    %40 = vector.broadcast %39 : vector<8x1x256xf32> to vector<8x16x256xf32>
    %41 = vector.broadcast %36 : vector<1x16x1xf32> to vector<8x16x256xf32>
    %42 = arith.subf %40, %41 : vector<8x16x256xf32>
    %43 = math.absf %42 : vector<8x16x256xf32>
    %cst_7 = arith.constant 1.000000e+00 : f32
    %44 = vector.broadcast %cst_7 : f32 to vector<8x16x256xf32>
    %45 = arith.subf %44, %43 : vector<8x16x256xf32>
    %cst_8 = arith.constant 0.000000e+00 : f32
    %46 = vector.broadcast %cst_8 : f32 to vector<8x16x256xf32>
    %47 = arith.maximumf %46, %45 : vector<8x16x256xf32>
    %48 = vector.shape_cast %34 : vector<8x256xf32> to vector<8x1x256xf32>
    %49 = vector.broadcast %48 : vector<8x1x256xf32> to vector<8x16x256xf32>
    %50 = vector.broadcast %38 : vector<1x16x1xf32> to vector<8x16x256xf32>
    %51 = arith.subf %49, %50 : vector<8x16x256xf32>
    %52 = math.absf %51 : vector<8x16x256xf32>
    %cst_9 = arith.constant 1.000000e+00 : f32
    %53 = vector.broadcast %cst_9 : f32 to vector<8x16x256xf32>
    %54 = arith.subf %53, %52 : vector<8x16x256xf32>
    %cst_10 = arith.constant 0.000000e+00 : f32
    %55 = vector.broadcast %cst_10 : f32 to vector<8x16x256xf32>
    %56 = arith.maximumf %55, %54 : vector<8x16x256xf32>
    %c0_11 = arith.constant 0 : index
    %c0_12 = arith.constant 0 : index
    %c0_13 = arith.constant 0 : index
    %57 = vector.load %arg4[%c0_11, %c0_12, %c0_13] : memref<8x16x16xbf16, #tpu.memory_space<vmem>>, vector<8x16x16xbf16>
    %58 = arith.truncf %47 : vector<8x16x256xf32> to vector<8x16x256xbf16>
    %cst_14 = arith.constant dense<0.000000e+00> : vector<8x16x256xf32>
    %59 = tpu.matmul %57, %58, %cst_14 {dimension_numbers = #tpu.dot_dimension_numbers<[2], [1], [1], [2], [0, 0, 0, 1, 1, 2], [0], [0]>} : vector<8x16x16xbf16>, vector<8x16x256xbf16>, vector<8x16x256xf32> -> vector<8x16x256xf32>
    %60 = arith.mulf %56, %59 : vector<8x16x256xf32>
    %cst_15 = arith.constant dense<0.000000e+00> : vector<8x256xf32>
    %61 = vector.multi_reduction <add>, %60, %cst_15 [1] : vector<8x16x256xf32> to vector<8x256xf32>
    %c0_16 = arith.constant 0 : index
    %c0_17 = arith.constant 0 : index
    %62 = vector.load %arg5[%c0_16, %c0_17] : memref<8x256xf32, #tpu.memory_space<vmem>>, vector<8x256xf32>
    tpu.vector_store %arg5[%c0_16, %c0_17], %61 {strides = array<i32>} : memref<8x256xf32, #tpu.memory_space<vmem>>, vector<8x256xf32>,
    return
  }
  func.func @transform_0(%arg0: i32, %arg1: i32) -> (i32, i32) {
    %c0_i32 = arith.constant 0 : i32
    %c0_i32_0 = arith.constant 0 : i32
    return %arg0, %c0_i32 : i32, i32
  }
  func.func @transform_1(%arg0: i32, %arg1: i32) -> (i32, i32) {
    %c0_i32 = arith.constant 0 : i32
    %c0_i32_0 = arith.constant 0 : i32
    return %c0_i32, %arg1 : i32, i32
  }
  func.func @transform_2(%arg0: i32, %arg1: i32) -> (i32, i32, i32) {
    %c0_i32 = arith.constant 0 : i32
    %c0_i32_0 = arith.constant 0 : i32
    %c0_i32_1 = arith.constant 0 : i32
    return %arg0, %c0_i32, %c0_i32_0 : i32, i32, i32
  }
  func.func @transform_3(%arg0: i32, %arg1: i32) -> (i32, i32) {
    %c0_i32 = arith.constant 0 : i32
    return %arg0, %arg1 : i32, i32
  }
}

</mosaic_0001>

<llo_original>
// kernel: tpu_custom_call.1
$region0: #{tpu_custom_call.1}
  #allocation0 [shape = 'u32[]', space=smem, size = 0x4, offset = 0x4, fixed_abs, tag = 'smem constant byte address 0x4 - core index']
  #allocation1 [shape = 'u32[144,128]{1,0:T(1,128)}', space=vmem, size = 0x12000, scoped, tag = 'internal scratch']
  %s0 = inlined_call_operand.hbm [shape: f32[8,6], index: 0, kind: input, shape index: {}]
  %s1 = inlined_call_operand.hbm [shape: f32[2,256], index: 1, kind: input, shape index: {}]
  %s2 = inlined_call_operand.hbm [shape: bf16[8,16,16], index: 2, kind: input, shape index: {}]
  %s3 = inlined_call_operand.hbm [shape: f32[8,256], index: 3, kind: output, shape index: {}]
  %s4 = sld [smem:[#allocation0]]
  $region34: #{tpu_custom_call.1} parent=0
    _
  %s6 = ssub.s32 1, %s4
  %s7 = scalar_select 0, %s6, %s4
  $region1: #{tpu_custom_call.1} parent=0
    #allocation2 [shape = 'u8[4096]{0}', space=vmem, size = 0x1000, scoped, tag = 'input window, operand 0, single buffered']
    #allocation3 [shape = 's32[1]{0}', space=sflag, size = 0x4, scoped, tag = 'scoped memory for tpu_custom_call.1']
    #allocation4 [shape = 's32[1]{0}', space=sflag, size = 0x4, scoped, tag = 'scoped memory for tpu_custom_call.1']
    #allocation5 [shape = 'u8[2048]{0}', space=vmem, size = 0x800, scoped, tag = 'input window, operand 1, single buffered']
    #allocation6 [shape = 's32[1]{0}', space=sflag, size = 0x4, scoped, tag = 'scoped memory for tpu_custom_call.1']
    #allocation7 [shape = 'u8[32768]{0}', space=vmem, size = 0x8000, scoped, tag = 'input window, operand 2, single buffered']
    #allocation8 [shape = 'u8[8192]{0}', space=vmem, size = 0x2000, scoped, tag = 'output window, operand 0, single buffered']
    %8 = vsyncpa [#allocation3], 0
    %9 = vsyncpa [#allocation6], 0
    %10 = vsyncpa [#allocation4], 0
    // Predicated region
    $region2: #{tpu_custom_call.1} parent=1 // pred_check
      _
    $region3: #{tpu_custom_call.1} parent=1 // pred_check_branch
      %12 = sbr.rel (0) target = $region5
    $region4: #{tpu_custom_call.1} parent=1 // pred_region
      %s14 = ssub.s32 128, 128
      %15 = vsyncadd [#allocation3], %s14
      %s17 = sshll.u32 [#allocation2], 4
      %s18 = int_to_ptr.vmem [resolvable:$true] %s17
      %20 = dma.hbm_to_vmem [thread:$0]  %s0, 128, %s18, [#allocation3]
    $region5: #{tpu_custom_call.1} parent=1 // pred_fallthru
      _
    // Predicated region
    $region6: #{tpu_custom_call.1} parent=1 // pred_check
      _
    $region7: #{tpu_custom_call.1} parent=1 // pred_check_branch
      %22 = sbr.rel (0) target = $region9
    $region8: #{tpu_custom_call.1} parent=1 // pred_region
      %s24 = ssub.s32 64, 64
      %25 = vsyncadd [#allocation6], %s24
      %s27 = sshll.u32 [#allocation5], 4
      %s28 = int_to_ptr.vmem [resolvable:$true] %s27
      %30 = dma.hbm_to_vmem [thread:$0]  %s1, 64, %s28, [#allocation6]
    $region9: #{tpu_custom_call.1} parent=1 // pred_fallthru
      _
    // Predicated region
    $region10: #{tpu_custom_call.1} parent=1 // pred_check
      _
    $region11: #{tpu_custom_call.1} parent=1 // pred_check_branch
      %32 = sbr.rel (0) target = $region13
    $region12: #{tpu_custom_call.1} parent=1 // pred_region
      %s34 = ssub.s32 1024, 1024
      %35 = vsyncadd [#allocation6], %s34
      %s36 = sshll.u32 [#allocation7], 4
      %s37 = int_to_ptr.vmem [resolvable:$true] %s36
      %42 = dma.hbm_to_vmem [thread:$0]  %s2, 1024, %s37, [#allocation6], 64, 64, 4
    $region13: #{tpu_custom_call.1} parent=1 // pred_fallthru
      _
    // Predicated region
    $region14: #{tpu_custom_call.1} parent=1 // pred_check
      _
    $region15: #{tpu_custom_call.1} parent=1 // pred_check_branch
      %44 = sbr.rel (0) target = $region17
    $region16: #{tpu_custom_call.1} parent=1 // pred_region
      %45 = dma.done [#allocation3], 128
    $region17: #{tpu_custom_call.1} parent=1 // pred_fallthru
      _
    // Predicated region
    $region18: #{tpu_custom_call.1} parent=1 // pred_check
      _
    $region19: #{tpu_custom_call.1} parent=1 // pred_check_branch
      %47 = sbr.rel (0) target = $region21
    $region20: #{tpu_custom_call.1} parent=1 // pred_region
      %48 = dma.done [#allocation6], 64
    $region21: #{tpu_custom_call.1} parent=1 // pred_fallthru
      _
    // Predicated region
    $region22: #{tpu_custom_call.1} parent=1 // pred_check
      _
    $region23: #{tpu_custom_call.1} parent=1 // pred_check_branch
      %50 = sbr.rel (0) target = $region25
    $region24: #{tpu_custom_call.1} parent=1 // pred_region
      %51 = dma.done [#allocation6], 1024
    $region25: #{tpu_custom_call.1} parent=1 // pred_fallthru
      _
    %v53 = vld [vmem:[#allocation5] ss:$2 sm:$0x3]
    %s54 = scalar_lea.vmem [#allocation5], 1
    %v55 = vld [vmem:[%s54] ss:$2 sm:$0x3]
    %v56 = vld [vmem:[#allocation2] sm:$0xff]
    %58 = vset.pattern.permute.xlu0 0
    %59 = vperm.xlu0 %58, %v56
    %v60 = vpop.permute.xlu0 %59
    %v63 = vlaneseq
    %v64 = vshrl.u32 %v63, 7
    %v65 = vsub.s32 0, %v64
    %v66 = vrot.slane %v53, %v65
    %v67 = vlaneseq
    %v68 = vshrl.u32 %v67, 7
    %v69 = vsub.s32 1, %v68
    %v70 = vrot.slane %v53, %v69
    %v73 = vmul.f32 %v60, %v66
    %v74 = vmul.f32 %v60, %v70
    %75 = vset.pattern.permute.xlu0 1
    %76 = vperm.xlu0 %75, %v56
    %v77 = vpop.permute.xlu0 %76
    %v80 = vlaneseq
    %v81 = vshrl.u32 %v80, 7
    %v82 = vsub.s32 0, %v81
    %v83 = vrot.slane %v55, %v82
    %v84 = vlaneseq
    %v85 = vshrl.u32 %v84, 7
    %v86 = vsub.s32 1, %v85
    %v87 = vrot.slane %v55, %v86
    %v90 = vmul.f32 %v77, %v83
    %v91 = vmul.f32 %v77, %v87
    %v92 = vadd.f32 %v73, %v90
    %v93 = vadd.f32 %v74, %v91
    %94 = vset.pattern.permute.xlu0 2
    %95 = vperm.xlu0 %94, %v56
    %v96 = vpop.permute.xlu0 %95
    %v98 = vadd.f32 %v92, %v96
    %v99 = vadd.f32 %v93, %v96
    %100 = vset.pattern.permute.xlu0 3
    %101 = vperm.xlu0 %100, %v56
    %v102 = vpop.permute.xlu0 %101
    %v104 = vmul.f32 %v102, %v66
    %v105 = vmul.f32 %v102, %v70
    %106 = vset.pattern.permute.xlu0 4
    %107 = vperm.xlu0 %106, %v56
    %v108 = vpop.permute.xlu0 %107
    %v110 = vmul.f32 %v108, %v83
    %v111 = vmul.f32 %v108, %v87
    %v112 = vadd.f32 %v104, %v110
    %v113 = vadd.f32 %v105, %v111
    %114 = vset.pattern.permute.xlu0 5
    %115 = vperm.xlu0 %114, %v56
    %v116 = vpop.permute.xlu0 %115
    %v118 = vadd.f32 %v112, %v116
    %v119 = vadd.f32 %v113, %v116
    %v120 = vadd.f32 %v98, 1.0
    %v121 = vadd.f32 %v99, 1.0
    %v122 = vmul.f32 %v120, 7.5
    %v123 = vmul.f32 %v121, 7.5
    %v124 = vadd.f32 %v118, 1.0
    %v125 = vadd.f32 %v119, 1.0
    %v126 = vmul.f32 %v124, 7.5
    %v127 = vmul.f32 %v125, 7.5
    %v128 = vlaneseq
    %v129 = vshrl.u32 %v128, 7
    %v130 = vadd.s32 %v129, 8
    %v131 = vcvt.s32.f32 %v129
    %v132 = vcvt.s32.f32 %v130
    %v135 = vcombine.low %v122, %v123
    %v136 = vcombine.high %v122, %v123
    %v138 = vunpack.c.l.s4 1966171168
    %v139 = vunpack.c.0.s8 %v138
    %v140 = vlaneseq
    %v141 = vshrl.u32 %v140, 7
    %v142 = vsub.s32 %v139, %v141
    %v143 = vrot.slane %v135, %v142
    %v145 = vunpack.c.l.s4 1966171168
    %v146 = vunpack.c.0.s8 %v145
    %v147 = vlaneseq
    %v148 = vshrl.u32 %v147, 7
    %v149 = vsub.s32 %v146, %v148
    %v150 = vrot.slane %v136, %v149
    %v151 = vcombine.high %v143, %v143
    %v152 = vcombine.high %v150, %v150
    %v154 = vunpack.c.l.s4 1966171168
    %v155 = vunpack.c.0.s8 %v154
    %v156 = vlaneseq
    %v157 = vshrl.u32 %v156, 7
    %v158 = vsub.s32 %v155, %v157
    %v159 = vrot.slane %v143, %v158
    %v161 = vunpack.c.l.s4 1966171168
    %v162 = vunpack.c.0.s8 %v161
    %v163 = vlaneseq
    %v164 = vshrl.u32 %v163, 7
    %v165 = vsub.s32 %v162, %v164
    %v166 = vrot.slane %v150, %v165
    %v168 = vunpack.c.l.s4 1966171168
    %v169 = vunpack.c.0.s8 %v168
    %v170 = vlaneseq
    %v171 = vshrl.u32 %v170, 7
    %v172 = vsub.s32 %v169, %v171
    %v173 = vrot.slane %v151, %v172
    %v175 = vunpack.c.l.s4 1966171168
    %v176 = vunpack.c.0.s8 %v175
    %v177 = vlaneseq
    %v178 = vshrl.u32 %v177, 7
    %v179 = vsub.s32 %v176, %v178
    %v180 = vrot.slane %v152, %v179
    %v181 = vcombine.high %v159, %v159
    %v182 = vcombine.high %v166, %v166
    %v183 = vcombine.high %v173, %v173
    %v184 = vcombine.high %v180, %v180
    %v185 = vlaneseq
    %v186 = vshrl.u32 %v185, 7
    %v187 = vsub.s32 0, %v186
    %v188 = vrot.slane %v159, %v187
    %v189 = vlaneseq
    %v190 = vshrl.u32 %v189, 7
    %v191 = vsub.s32 1, %v190
    %v192 = vrot.slane %v159, %v191
    %v193 = vlaneseq
    %v194 = vshrl.u32 %v193, 7
    %v195 = vsub.s32 0, %v194
    %v196 = vrot.slane %v173, %v195
    %v197 = vlaneseq
    %v198 = vshrl.u32 %v197, 7
    %v199 = vsub.s32 1, %v198
    %v200 = vrot.slane %v173, %v199
    %v201 = vlaneseq
    %v202 = vshrl.u32 %v201, 7
    %v203 = vsub.s32 0, %v202
    %v204 = vrot.slane %v181, %v203
    %v205 = vlaneseq
    %v206 = vshrl.u32 %v205, 7
    %v207 = vsub.s32 1, %v206
    %v208 = vrot.slane %v181, %v207
    %v209 = vlaneseq
    %v210 = vshrl.u32 %v209, 7
    %v211 = vsub.s32 0, %v210
    %v212 = vrot.slane %v183, %v211
    %v213 = vlaneseq
    %v214 = vshrl.u32 %v213, 7
    %v215 = vsub.s32 1, %v214
    %v216 = vrot.slane %v183, %v215
    %v217 = vlaneseq
    %v218 = vshrl.u32 %v217, 7
    %v219 = vsub.s32 0, %v218
    %v220 = vrot.slane %v166, %v219
    %v221 = vlaneseq
    %v222 = vshrl.u32 %v221, 7
    %v223 = vsub.s32 1, %v222
    %v224 = vrot.slane %v166, %v223
    %v225 = vlaneseq
    %v226 = vshrl.u32 %v225, 7
    %v227 = vsub.s32 0, %v226
    %v228 = vrot.slane %v180, %v227
    %v229 = vlaneseq
    %v230 = vshrl.u32 %v229, 7
    %v231 = vsub.s32 1, %v230
    %v232 = vrot.slane %v180, %v231
    %v233 = vlaneseq
    %v234 = vshrl.u32 %v233, 7
    %v235 = vsub.s32 0, %v234
    %v236 = vrot.slane %v182, %v235
    %v237 = vlaneseq
    %v238 = vshrl.u32 %v237, 7
    %v239 = vsub.s32 1, %v238
    %v240 = vrot.slane %v182, %v239
    %v241 = vlaneseq
    %v242 = vshrl.u32 %v241, 7
    %v243 = vsub.s32 0, %v242
    %v244 = vrot.slane %v184, %v243
    %v245 = vlaneseq
    %v246 = vshrl.u32 %v245, 7
    %v247 = vsub.s32 1, %v246
    %v248 = vrot.slane %v184, %v247
    %v265 = vsub.f32 %v188, %v131
    %v266 = vsub.f32 %v192, %v131
    %v267 = vsub.f32 %v188, %v132
    %v268 = vsub.f32 %v192, %v132
    %v269 = vsub.f32 %v196, %v131
    %v270 = vsub.f32 %v200, %v131
    %v271 = vsub.f32 %v196, %v132
    %v272 = vsub.f32 %v200, %v132
    %v273 = vsub.f32 %v204, %v131
    %v274 = vsub.f32 %v208, %v131
    %v275 = vsub.f32 %v204, %v132
    %v276 = vsub.f32 %v208, %v132
    %v277 = vsub.f32 %v212, %v131
    %v278 = vsub.f32 %v216, %v131
    %v279 = vsub.f32 %v212, %v132
    %v280 = vsub.f32 %v216, %v132
    %v281 = vsub.f32 %v220, %v131
    %v282 = vsub.f32 %v224, %v131
    %v283 = vsub.f32 %v220, %v132
    %v284 = vsub.f32 %v224, %v132
    %v285 = vsub.f32 %v228, %v131
    %v286 = vsub.f32 %v232, %v131
    %v287 = vsub.f32 %v228, %v132
    %v288 = vsub.f32 %v232, %v132
    %v289 = vsub.f32 %v236, %v131
    %v290 = vsub.f32 %v240, %v131
    %v291 = vsub.f32 %v236, %v132
    %v292 = vsub.f32 %v240, %v132
    %v293 = vsub.f32 %v244, %v131
    %v294 = vsub.f32 %v248, %v131
    %v295 = vsub.f32 %v244, %v132
    %v296 = vsub.f32 %v248, %v132
    %v297 = vand.u32 2147483647, %v265
    %v298 = vand.u32 2147483647, %v266
    %v299 = vand.u32 2147483647, %v267
    %v300 = vand.u32 2147483647, %v268
    %v301 = vand.u32 2147483647, %v269
    %v302 = vand.u32 2147483647, %v270
    %v303 = vand.u32 2147483647, %v271
    %v304 = vand.u32 2147483647, %v272
    %v305 = vand.u32 2147483647, %v273
    %v306 = vand.u32 2147483647, %v274
    %v307 = vand.u32 2147483647, %v275
    %v308 = vand.u32 2147483647, %v276
    %v309 = vand.u32 2147483647, %v277
    %v310 = vand.u32 2147483647, %v278
    %v311 = vand.u32 2147483647, %v279
    %v312 = vand.u32 2147483647, %v280
    %v313 = vand.u32 2147483647, %v281
    %v314 = vand.u32 2147483647, %v282
    %v315 = vand.u32 2147483647, %v283
    %v316 = vand.u32 2147483647, %v284
    %v317 = vand.u32 2147483647, %v285
    %v318 = vand.u32 2147483647, %v286
    %v319 = vand.u32 2147483647, %v287
    %v320 = vand.u32 2147483647, %v288
    %v321 = vand.u32 2147483647, %v289
    %v322 = vand.u32 2147483647, %v290
    %v323 = vand.u32 2147483647, %v291
    %v324 = vand.u32 2147483647, %v292
    %v325 = vand.u32 2147483647, %v293
    %v326 = vand.u32 2147483647, %v294
    %v327 = vand.u32 2147483647, %v295
    %v328 = vand.u32 2147483647, %v296
    %v329 = vsub.f32 1.0, %v297
    %v330 = vsub.f32 1.0, %v298
    %v331 = vsub.f32 1.0, %v299
    %v332 = vsub.f32 1.0, %v300
    %v333 = vsub.f32 1.0, %v301
    %v334 = vsub.f32 1.0, %v302
    %v335 = vsub.f32 1.0, %v303
    %v336 = vsub.f32 1.0, %v304
    %v337 = vsub.f32 1.0, %v305
    %v338 = vsub.f32 1.0, %v306
    %v339 = vsub.f32 1.0, %v307
    %v340 = vsub.f32 1.0, %v308
    %v341 = vsub.f32 1.0, %v309
    %v342 = vsub.f32 1.0, %v310
    %v343 = vsub.f32 1.0, %v311
    %v344 = vsub.f32 1.0, %v312
    %v345 = vsub.f32 1.0, %v313
    %v346 = vsub.f32 1.0, %v314
    %v347 = vsub.f32 1.0, %v315
    %v348 = vsub.f32 1.0, %v316
    %v349 = vsub.f32 1.0, %v317
    %v350 = vsub.f32 1.0, %v318
    %v351 = vsub.f32 1.0, %v319
    %v352 = vsub.f32 1.0, %v320
    %v353 = vsub.f32 1.0, %v321
    %v354 = vsub.f32 1.0, %v322
    %v355 = vsub.f32 1.0, %v323
    %v356 = vsub.f32 1.0, %v324
    %v357 = vsub.f32 1.0, %v325
    %v358 = vsub.f32 1.0, %v326
    %v359 = vsub.f32 1.0, %v327
    %v360 = vsub.f32 1.0, %v328
    %v361 = vmax.f32 %v329, 0.0
    %v362 = vmax.f32 %v330, 0.0
    %v363 = vmax.f32 %v331, 0.0
    %v364 = vmax.f32 %v332, 0.0
    %v365 = vmax.f32 %v333, 0.0
    %v366 = vmax.f32 %v334, 0.0
    %v367 = vmax.f32 %v335, 0.0
    %v368 = vmax.f32 %v336, 0.0
    %v369 = vmax.f32 %v337, 0.0
    %v370 = vmax.f32 %v338, 0.0
    %v371 = vmax.f32 %v339, 0.0
    %v372 = vmax.f32 %v340, 0.0
    %v373 = vmax.f32 %v341, 0.0
    %v374 = vmax.f32 %v342, 0.0
    %v375 = vmax.f32 %v343, 0.0
    %v376 = vmax.f32 %v344, 0.0
    %v377 = vmax.f32 %v345, 0.0
    %v378 = vmax.f32 %v346, 0.0
    %v379 = vmax.f32 %v347, 0.0
    %v380 = vmax.f32 %v348, 0.0
    %v381 = vmax.f32 %v349, 0.0
    %v382 = vmax.f32 %v350, 0.0
    %v383 = vmax.f32 %v351, 0.0
    %v384 = vmax.f32 %v352, 0.0
    %v385 = vmax.f32 %v353, 0.0
    %v386 = vmax.f32 %v354, 0.0
    %v387 = vmax.f32 %v355, 0.0
    %v388 = vmax.f32 %v356, 0.0
    %v389 = vmax.f32 %v357, 0.0
    %v390 = vmax.f32 %v358, 0.0
    %v391 = vmax.f32 %v359, 0.0
    %v392 = vmax.f32 %v360, 0.0
    %v395 = vcombine.low %v126, %v127
    %v396 = vcombine.high %v126, %v127
    %v398 = vunpack.c.l.s4 1966171168
    %v399 = vunpack.c.0.s8 %v398
    %v400 = vlaneseq
    %v401 = vshrl.u32 %v400, 7
    %v402 = vsub.s32 %v399, %v401
    %v403 = vrot.slane %v395, %v402
    %v405 = vunpack.c.l.s4 1966171168
    %v406 = vunpack.c.0.s8 %v405
    %v407 = vlaneseq
    %v408 = vshrl.u32 %v407, 7
    %v409 = vsub.s32 %v406, %v408
    %v410 = vrot.slane %v396, %v409
    %v411 = vcombine.high %v403, %v403
    %v412 = vcombine.high %v410, %v410
    %v414 = vunpack.c.l.s4 1966171168
    %v415 = vunpack.c.0.s8 %v414
    %v416 = vlaneseq
    %v417 = vshrl.u32 %v416, 7
    %v418 = vsub.s32 %v415, %v417
    %v419 = vrot.slane %v403, %v418
    %v421 = vunpack.c.l.s4 1966171168
    %v422 = vunpack.c.0.s8 %v421
    %v423 = vlaneseq
    %v424 = vshrl.u32 %v423, 7
    %v425 = vsub.s32 %v422, %v424
    %v426 = vrot.slane %v410, %v425
    %v428 = vunpack.c.l.s4 1966171168
    %v429 = vunpack.c.0.s8 %v428
    %v430 = vlaneseq
    %v431 = vshrl.u32 %v430, 7
    %v432 = vsub.s32 %v429, %v431
    %v433 = vrot.slane %v411, %v432
    %v435 = vunpack.c.l.s4 1966171168
    %v436 = vunpack.c.0.s8 %v435
    %v437 = vlaneseq
    %v438 = vshrl.u32 %v437, 7
    %v439 = vsub.s32 %v436, %v438
    %v440 = vrot.slane %v412, %v439
    %v441 = vcombine.high %v419, %v419
    %v442 = vcombine.high %v426, %v426
    %v443 = vcombine.high %v433, %v433
    %v444 = vcombine.high %v440, %v440
    %v445 = vlaneseq
    %v446 = vshrl.u32 %v445, 7
    %v447 = vsub.s32 0, %v446
    %v448 = vrot.slane %v419, %v447
    %v449 = vlaneseq
    %v450 = vshrl.u32 %v449, 7
    %v451 = vsub.s32 1, %v450
    %v452 = vrot.slane %v419, %v451
    %v453 = vlaneseq
    %v454 = vshrl.u32 %v453, 7
    %v455 = vsub.s32 0, %v454
    %v456 = vrot.slane %v433, %v455
    %v457 = vlaneseq
    %v458 = vshrl.u32 %v457, 7
    %v459 = vsub.s32 1, %v458
    %v460 = vrot.slane %v433, %v459
    %v461 = vlaneseq
    %v462 = vshrl.u32 %v461, 7
    %v463 = vsub.s32 0, %v462
    %v464 = vrot.slane %v441, %v463
    %v465 = vlaneseq
    %v466 = vshrl.u32 %v465, 7
    %v467 = vsub.s32 1, %v466
    %v468 = vrot.slane %v441, %v467
    %v469 = vlaneseq
    %v470 = vshrl.u32 %v469, 7
    %v471 = vsub.s32 0, %v470
    %v472 = vrot.slane %v443, %v471
    %v473 = vlaneseq
    %v474 = vshrl.u32 %v473, 7
    %v475 = vsub.s32 1, %v474
    %v476 = vrot.slane %v443, %v475
    %v477 = vlaneseq
    %v478 = vshrl.u32 %v477, 7
    %v479 = vsub.s32 0, %v478
    %v480 = vrot.slane %v426, %v479
    %v481 = vlaneseq
    %v482 = vshrl.u32 %v481, 7
    %v483 = vsub.s32 1, %v482
    %v484 = vrot.slane %v426, %v483
    %v485 = vlaneseq
    %v486 = vshrl.u32 %v485, 7
    %v487 = vsub.s32 0, %v486
    %v488 = vrot.slane %v440, %v487
    %v489 = vlaneseq
    %v490 = vshrl.u32 %v489, 7
    %v491 = vsub.s32 1, %v490
    %v492 = vrot.slane %v440, %v491
    %v493 = vlaneseq
    %v494 = vshrl.u32 %v493, 7
    %v495 = vsub.s32 0, %v494
    %v496 = vrot.slane %v442, %v495
    %v497 = vlaneseq
    %v498 = vshrl.u32 %v497, 7
    %v499 = vsub.s32 1, %v498
    %v500 = vrot.slane %v442, %v499
    %v501 = vlaneseq
    %v502 = vshrl.u32 %v501, 7
    %v503 = vsub.s32 0, %v502
    %v504 = vrot.slane %v444, %v503
    %v505 = vlaneseq
    %v506 = vshrl.u32 %v505, 7
    %v507 = vsub.s32 1, %v506
    %v508 = vrot.slane %v444, %v507
    %v525 = vsub.f32 %v448, %v131
    %v526 = vsub.f32 %v452, %v131
    %v527 = vsub.f32 %v448, %v132
    %v528 = vsub.f32 %v452, %v132
    %v529 = vsub.f32 %v456, %v131
    %v530 = vsub.f32 %v460, %v131
    %v531 = vsub.f32 %v456, %v132
    %v532 = vsub.f32 %v460, %v132
    %v533 = vsub.f32 %v464, %v131
    %v534 = vsub.f32 %v468, %v131
    %v535 = vsub.f32 %v464, %v132
    %v536 = vsub.f32 %v468, %v132
    %v537 = vsub.f32 %v472, %v131
    %v538 = vsub.f32 %v476, %v131
    %v539 = vsub.f32 %v472, %v132
    %v540 = vsub.f32 %v476, %v132
    %v541 = vsub.f32 %v480, %v131
    %v542 = vsub.f32 %v484, %v131
    %v543 = vsub.f32 %v480, %v132
    %v544 = vsub.f32 %v484, %v132
    %v545 = vsub.f32 %v488, %v131
    %v546 = vsub.f32 %v492, %v131
    %v547 = vsub.f32 %v488, %v132
    %v548 = vsub.f32 %v492, %v132
    %v549 = vsub.f32 %v496, %v131
    %v550 = vsub.f32 %v500, %v131
    %v551 = vsub.f32 %v496, %v132
    %v552 = vsub.f32 %v500, %v132
    %v553 = vsub.f32 %v504, %v131
    %v554 = vsub.f32 %v508, %v131
    %v555 = vsub.f32 %v504, %v132
    %v556 = vsub.f32 %v508, %v132
    %v557 = vand.u32 2147483647, %v525
    %v558 = vand.u32 2147483647, %v526
    %v559 = vand.u32 2147483647, %v527
    %v560 = vand.u32 2147483647, %v528
    %v561 = vand.u32 2147483647, %v529
    %v562 = vand.u32 2147483647, %v530
    %v563 = vand.u32 2147483647, %v531
    %v564 = vand.u32 2147483647, %v532
    %v565 = vand.u32 2147483647, %v533
    %v566 = vand.u32 2147483647, %v534
    %v567 = vand.u32 2147483647, %v535
    %v568 = vand.u32 2147483647, %v536
    %v569 = vand.u32 2147483647, %v537
    %v570 = vand.u32 2147483647, %v538
    %v571 = vand.u32 2147483647, %v539
    %v572 = vand.u32 2147483647, %v540
    %v573 = vand.u32 2147483647, %v541
    %v574 = vand.u32 2147483647, %v542
    %v575 = vand.u32 2147483647, %v543
    %v576 = vand.u32 2147483647, %v544
    %v577 = vand.u32 2147483647, %v545
    %v578 = vand.u32 2147483647, %v546
    %v579 = vand.u32 2147483647, %v547
    %v580 = vand.u32 2147483647, %v548
    %v581 = vand.u32 2147483647, %v549
    %v582 = vand.u32 2147483647, %v550
    %v583 = vand.u32 2147483647, %v551
    %v584 = vand.u32 2147483647, %v552
    %v585 = vand.u32 2147483647, %v553
    %v586 = vand.u32 2147483647, %v554
    %v587 = vand.u32 2147483647, %v555
    %v588 = vand.u32 2147483647, %v556
    %v589 = vsub.f32 1.0, %v557
    %v590 = vsub.f32 1.0, %v558
    %v591 = vsub.f32 1.0, %v559
    %v592 = vsub.f32 1.0, %v560
    %v593 = vsub.f32 1.0, %v561
    %v594 = vsub.f32 1.0, %v562
    %v595 = vsub.f32 1.0, %v563
    %v596 = vsub.f32 1.0, %v564
    %v597 = vsub.f32 1.0, %v565
    %v598 = vsub.f32 1.0, %v566
    %v599 = vsub.f32 1.0, %v567
    %v600 = vsub.f32 1.0, %v568
    %v601 = vsub.f32 1.0, %v569
    %v602 = vsub.f32 1.0, %v570
    %v603 = vsub.f32 1.0, %v571
    %v604 = vsub.f32 1.0, %v572
    %v605 = vsub.f32 1.0, %v573
    %v606 = vsub.f32 1.0, %v574
    %v607 = vsub.f32 1.0, %v575
    %v608 = vsub.f32 1.0, %v576
    %v609 = vsub.f32 1.0, %v577
    %v610 = vsub.f32 1.0, %v578
    %v611 = vsub.f32 1.0, %v579
    %v612 = vsub.f32 1.0, %v580
    %v613 = vsub.f32 1.0, %v581
    %v614 = vsub.f32 1.0, %v582
    %v615 = vsub.f32 1.0, %v583
    %v616 = vsub.f32 1.0, %v584
    %v617 = vsub.f32 1.0, %v585
    %v618 = vsub.f32 1.0, %v586
    %v619 = vsub.f32 1.0, %v587
    %v620 = vsub.f32 1.0, %v588
    %v621 = vmax.f32 %v589, 0.0
    %v622 = vmax.f32 %v590, 0.0
    %v623 = vmax.f32 %v591, 0.0
    %v624 = vmax.f32 %v592, 0.0
    %v625 = vmax.f32 %v593, 0.0
    %v626 = vmax.f32 %v594, 0.0
    %v627 = vmax.f32 %v595, 0.0
    %v628 = vmax.f32 %v596, 0.0
    %v629 = vmax.f32 %v597, 0.0
    %v630 = vmax.f32 %v598, 0.0
    %v631 = vmax.f32 %v599, 0.0
    %v632 = vmax.f32 %v600, 0.0
    %v633 = vmax.f32 %v601, 0.0
    %v634 = vmax.f32 %v602, 0.0
    %v635 = vmax.f32 %v603, 0.0
    %v636 = vmax.f32 %v604, 0.0
    %v637 = vmax.f32 %v605, 0.0
    %v638 = vmax.f32 %v606, 0.0
    %v639 = vmax.f32 %v607, 0.0
    %v640 = vmax.f32 %v608, 0.0
    %v641 = vmax.f32 %v609, 0.0
    %v642 = vmax.f32 %v610, 0.0
    %v643 = vmax.f32 %v611, 0.0
    %v644 = vmax.f32 %v612, 0.0
    %v645 = vmax.f32 %v613, 0.0
    %v646 = vmax.f32 %v614, 0.0
    %v647 = vmax.f32 %v615, 0.0
    %v648 = vmax.f32 %v616, 0.0
    %v649 = vmax.f32 %v617, 0.0
    %v650 = vmax.f32 %v618, 0.0
    %v651 = vmax.f32 %v619, 0.0
    %v652 = vmax.f32 %v620, 0.0
    %v653 = vld [vmem:[#allocation7] sm:$0xf]
    %v654 = vld [vmem:[#allocation7 + $0x4] sm:$0xf]
    %v655 = vld [vmem:[#allocation7 + $0x8] sm:$0xf]
    %v656 = vld [vmem:[#allocation7 + $0xc] sm:$0xf]
    %v657 = vld [vmem:[#allocation7 + $0x10] sm:$0xf]
    %v658 = vld [vmem:[#allocation7 + $0x14] sm:$0xf]
    %v659 = vld [vmem:[#allocation7 + $0x18] sm:$0xf]
    %v660 = vld [vmem:[#allocation7 + $0x1c] sm:$0xf]
    %v661 = vld [vmem:[#allocation7 + $0x20] sm:$0xf]
    %v662 = vld [vmem:[#allocation7 + $0x24] sm:$0xf]
    %v663 = vld [vmem:[#allocation7 + $0x28] sm:$0xf]
    %v664 = vld [vmem:[#allocation7 + $0x2c] sm:$0xf]
    %v665 = vld [vmem:[#allocation7 + $0x30] sm:$0xf]
    %v666 = vld [vmem:[#allocation7 + $0x34] sm:$0xf]
    %v667 = vld [vmem:[#allocation7 + $0x38] sm:$0xf]
    %v668 = vld [vmem:[#allocation7 + $0x3c] sm:$0xf]
    %v669 = vpack.c.bf16 %v363, %v361
    %v670 = vpack.c.bf16 %v364, %v362
    %v671 = vpack.c.bf16 %v367, %v365
    %v672 = vpack.c.bf16 %v368, %v366
    %v673 = vpack.c.bf16 %v371, %v369
    %v674 = vpack.c.bf16 %v372, %v370
    %v675 = vpack.c.bf16 %v375, %v373
    %v676 = vpack.c.bf16 %v376, %v374
    %v677 = vpack.c.bf16 %v379, %v377
    %v678 = vpack.c.bf16 %v380, %v378
    %v679 = vpack.c.bf16 %v383, %v381
    %v680 = vpack.c.bf16 %v384, %v382
    %v681 = vpack.c.bf16 %v387, %v385
    %v682 = vpack.c.bf16 %v388, %v386
    %v683 = vpack.c.bf16 %v391, %v389
    %v684 = vpack.c.bf16 %v392, %v390
    %v687 = vunpack.c.l.b16 %v653
    %v688 = vunpack.c.l.b16 %v654
    %v689 = vpack.c.b16 %v688, %v687
    %vm690 = vcmask 130048
    %v692 = vsel %vm690, %v689, 0
    %694 = vmatprep.subr.bf16.mxu0 %v670
    %695 = vmatpush1.bf16.msra.mxu0 %v669
    %696 = vmatprep.subr.bf16.mxu0 0
    %697 = vmatpush1.bf16.msra.mxu0 0
    %698 = vmatprep.subr.bf16.mxu0 0
    %699 = vmatpush1.bf16.msra.mxu0 0
    %700 = vmatprep.subr.bf16.mxu0 0
    %701 = vmatpush1.bf16.msra.mxu0 0
    %702 = vmatprep.subr.bf16.mxu0 0
    %703 = vmatpush1.bf16.msra.mxu0 0
    %704 = vmatprep.subr.bf16.mxu0 0
    %705 = vmatpush1.bf16.msra.mxu0 0
    %706 = vmatprep.subr.bf16.mxu0 0
    %707 = vmatpush1.bf16.msra.mxu0 0
    %708 = vmatprep.subr.bf16.mxu0 0
    %709 = vmatpush1.bf16.msra.mxu0 0
    %710 = vmatprep.subr.bf16.mxu0 0
    %711 = vmatpush1.bf16.msra.mxu0 0
    %712 = vmatprep.subr.bf16.mxu0 0
    %713 = vmatpush1.bf16.msra.mxu0 0
    %714 = vmatprep.subr.bf16.mxu0 0
    %715 = vmatpush1.bf16.msra.mxu0 0
    %716 = vmatprep.subr.bf16.mxu0 0
    %717 = vmatpush1.bf16.msra.mxu0 0
    %718 = vmatprep.subr.bf16.mxu0 0
    %719 = vmatpush1.bf16.msra.mxu0 0
    %720 = vmatprep.subr.bf16.mxu0 0
    %721 = vmatpush1.bf16.msra.mxu0 0
    %722 = vmatprep.subr.bf16.mxu0 0
    %723 = vmatpush1.bf16.msra.mxu0 0
    %724 = vmatprep.subr.bf16.mxu0 0
    %725 = vmatpush1.bf16.msra.mxu0 0
    %726 = vmatprep.mubr.bf16.mxu0 0
    %727 = vmatmul.mubr.bf16.gmra.mrb[0].mxu0 %v692
    %v728 = vpop.f32.mrb[0].mxu0
    %v729 = vadd.f32 0.0, %v728
    %v730 = vpop.f32.mrb[0].mxu0
    %v731 = vadd.f32 0.0, %v730
    %v732 = vpop.f32.mrb[0].mxu0
    %v733 = vadd.f32 0.0, %v732
    %v734 = vpop.f32.mrb[0].mxu0
    %v735 = vadd.f32 0.0, %v734
    %736 = vdwg.mxu0
    %v739 = vunpack.c.l.b16 %v655
    %v740 = vunpack.c.l.b16 %v656
    %v741 = vpack.c.b16 %v740, %v739
    %v743 = vsel %vm690, %v741, 0
    %745 = vmatprep.subr.bf16.mxu0 %v672
    %746 = vmatpush1.bf16.msra.mxu0 %v671
    %747 = vmatprep.subr.bf16.mxu0 0
    %748 = vmatpush1.bf16.msra.mxu0 0
    %749 = vmatprep.subr.bf16.mxu0 0
    %750 = vmatpush1.bf16.msra.mxu0 0
    %751 = vmatprep.subr.bf16.mxu0 0
    %752 = vmatpush1.bf16.msra.mxu0 0
    %753 = vmatprep.subr.bf16.mxu0 0
    %754 = vmatpush1.bf16.msra.mxu0 0
    %755 = vmatprep.subr.bf16.mxu0 0
    %756 = vmatpush1.bf16.msra.mxu0 0
    %757 = vmatprep.subr.bf16.mxu0 0
    %758 = vmatpush1.bf16.msra.mxu0 0
    %759 = vmatprep.subr.bf16.mxu0 0
    %760 = vmatpush1.bf16.msra.mxu0 0
    %761 = vmatprep.subr.bf16.mxu0 0
    %762 = vmatpush1.bf16.msra.mxu0 0
    %763 = vmatprep.subr.bf16.mxu0 0
    %764 = vmatpush1.bf16.msra.mxu0 0
    %765 = vmatprep.subr.bf16.mxu0 0
    %766 = vmatpush1.bf16.msra.mxu0 0
    %767 = vmatprep.subr.bf16.mxu0 0
    %768 = vmatpush1.bf16.msra.mxu0 0
    %769 = vmatprep.subr.bf16.mxu0 0
    %770 = vmatpush1.bf16.msra.mxu0 0
    %771 = vmatprep.subr.bf16.mxu0 0
    %772 = vmatpush1.bf16.msra.mxu0 0
    %773 = vmatprep.subr.bf16.mxu0 0
    %774 = vmatpush1.bf16.msra.mxu0 0
    %775 = vmatprep.subr.bf16.mxu0 0
    %776 = vmatpush1.bf16.msra.mxu0 0
    %777 = vmatprep.mubr.bf16.mxu0 0
    %778 = vmatmul.mubr.bf16.gmra.mrb[0].mxu0 %v743
    %v779 = vpop.f32.mrb[0].mxu0
    %v780 = vadd.f32 0.0, %v779
    %v781 = vpop.f32.mrb[0].mxu0
    %v782 = vadd.f32 0.0, %v781
    %v783 = vpop.f32.mrb[0].mxu0
    %v784 = vadd.f32 0.0, %v783
    %v785 = vpop.f32.mrb[0].mxu0
    %v786 = vadd.f32 0.0, %v785
    %787 = vdwg.mxu0
    %v790 = vunpack.c.l.b16 %v657
    %v791 = vunpack.c.l.b16 %v658
    %v792 = vpack.c.b16 %v791, %v790
    %v794 = vsel %vm690, %v792, 0
    %796 = vmatprep.subr.bf16.mxu0 %v674
    %797 = vmatpush1.bf16.msra.mxu0 %v673
    %798 = vmatprep.subr.bf16.mxu0 0
    %799 = vmatpush1.bf16.msra.mxu0 0
    %800 = vmatprep.subr.bf16.mxu0 0
    %801 = vmatpush1.bf16.msra.mxu0 0
    %802 = vmatprep.subr.bf16.mxu0 0
    %803 = vmatpush1.bf16.msra.mxu0 0
    %804 = vmatprep.subr.bf16.mxu0 0
    %805 = vmatpush1.bf16.msra.mxu0 0
    %806 = vmatprep.subr.bf16.mxu0 0
    %807 = vmatpush1.bf16.msra.mxu0 0
    %808 = vmatprep.subr.bf16.mxu0 0
    %809 = vmatpush1.bf16.msra.mxu0 0
    %810 = vmatprep.subr.bf16.mxu0 0
    %811 = vmatpush1.bf16.msra.mxu0 0
    %812 = vmatprep.subr.bf16.mxu0 0
    %813 = vmatpush1.bf16.msra.mxu0 0
    %814 = vmatprep.subr.bf16.mxu0 0
    %815 = vmatpush1.bf16.msra.mxu0 0
    %816 = vmatprep.subr.bf16.mxu0 0
    %817 = vmatpush1.bf16.msra.mxu0 0
    %818 = vmatprep.subr.bf16.mxu0 0
    %819 = vmatpush1.bf16.msra.mxu0 0
    %820 = vmatprep.subr.bf16.mxu0 0
    %821 = vmatpush1.bf16.msra.mxu0 0
    %822 = vmatprep.subr.bf16.mxu0 0
    %823 = vmatpush1.bf16.msra.mxu0 0
    %824 = vmatprep.subr.bf16.mxu0 0
    %825 = vmatpush1.bf16.msra.mxu0 0
    %826 = vmatprep.subr.bf16.mxu0 0
    %827 = vmatpush1.bf16.msra.mxu0 0
    %828 = vmatprep.mubr.bf16.mxu0 0
    %829 = vmatmul.mubr.bf16.gmra.mrb[0].mxu0 %v794
    %v830 = vpop.f32.mrb[0].mxu0
    %v831 = vadd.f32 0.0, %v830
    %v832 = vpop.f32.mrb[0].mxu0
    %v833 = vadd.f32 0.0, %v832
    %v834 = vpop.f32.mrb[0].mxu0
    %v835 = vadd.f32 0.0, %v834
    %v836 = vpop.f32.mrb[0].mxu0
    %v837 = vadd.f32 0.0, %v836
    %838 = vdwg.mxu0
    %v841 = vunpack.c.l.b16 %v659
    %v842 = vunpack.c.l.b16 %v660
    %v843 = vpack.c.b16 %v842, %v841
    %v845 = vsel %vm690, %v843, 0
    %847 = vmatprep.subr.bf16.mxu0 %v676
    %848 = vmatpush1.bf16.msra.mxu0 %v675
    %849 = vmatprep.subr.bf16.mxu0 0
    %850 = vmatpush1.bf16.msra.mxu0 0
    %851 = vmatprep.subr.bf16.mxu0 0
    %852 = vmatpush1.bf16.msra.mxu0 0
    %853 = vmatprep.subr.bf16.mxu0 0
    %854 = vmatpush1.bf16.msra.mxu0 0
    %855 = vmatprep.subr.bf16.mxu0 0
    %856 = vmatpush1.bf16.msra.mxu0 0
    %857 = vmatprep.subr.bf16.mxu0 0
    %858 = vmatpush1.bf16.msra.mxu0 0
    %859 = vmatprep.subr.bf16.mxu0 0
    %860 = vmatpush1.bf16.msra.mxu0 0
    %861 = vmatprep.subr.bf16.mxu0 0
    %862 = vmatpush1.bf16.msra.mxu0 0
    %863 = vmatprep.subr.bf16.mxu0 0
    %864 = vmatpush1.bf16.msra.mxu0 0
    %865 = vmatprep.subr.bf16.mxu0 0
    %866 = vmatpush1.bf16.msra.mxu0 0
    %867 = vmatprep.subr.bf16.mxu0 0
    %868 = vmatpush1.bf16.msra.mxu0 0
    %869 = vmatprep.subr.bf16.mxu0 0
    %870 = vmatpush1.bf16.msra.mxu0 0
    %871 = vmatprep.subr.bf16.mxu0 0
    %872 = vmatpush1.bf16.msra.mxu0 0
    %873 = vmatprep.subr.bf16.mxu0 0
    %874 = vmatpush1.bf16.msra.mxu0 0
    %875 = vmatprep.subr.bf16.mxu0 0
    %876 = vmatpush1.bf16.msra.mxu0 0
    %877 = vmatprep.subr.bf16.mxu0 0
    %878 = vmatpush1.bf16.msra.mxu0 0
    %879 = vmatprep.mubr.bf16.mxu0 0
    %880 = vmatmul.mubr.bf16.gmra.mrb[0].mxu0 %v845
    %v881 = vpop.f32.mrb[0].mxu0
    %v882 = vadd.f32 0.0, %v881
    %v883 = vpop.f32.mrb[0].mxu0
    %v884 = vadd.f32 0.0, %v883
    %v885 = vpop.f32.mrb[0].mxu0
    %v886 = vadd.f32 0.0, %v885
    %v887 = vpop.f32.mrb[0].mxu0
    %v888 = vadd.f32 0.0, %v887
    %889 = vdwg.mxu0
    %v892 = vunpack.c.l.b16 %v661
    %v893 = vunpack.c.l.b16 %v662
    %v894 = vpack.c.b16 %v893, %v892
    %v896 = vsel %vm690, %v894, 0
    %898 = vmatprep.subr.bf16.mxu0 %v678
    %899 = vmatpush1.bf16.msra.mxu0 %v677
    %900 = vmatprep.subr.bf16.mxu0 0
    %901 = vmatpush1.bf16.msra.mxu0 0
    %902 = vmatprep.subr.bf16.mxu0 0
    %903 = vmatpush1.bf16.msra.mxu0 0
    %904 = vmatprep.subr.bf16.mxu0 0
    %905 = vmatpush1.bf16.msra.mxu0 0
    %906 = vmatprep.subr.bf16.mxu0 0
    %907 = vmatpush1.bf16.msra.mxu0 0
    %908 = vmatprep.subr.bf16.mxu0 0
    %909 = vmatpush1.bf16.msra.mxu0 0
    %910 = vmatprep.subr.bf16.mxu0 0
    %911 = vmatpush1.bf16.msra.mxu0 0
    %912 = vmatprep.subr.bf16.mxu0 0
    %913 = vmatpush1.bf16.msra.mxu0 0
    %914 = vmatprep.subr.bf16.mxu0 0
    %915 = vmatpush1.bf16.msra.mxu0 0
    %916 = vmatprep.subr.bf16.mxu0 0
    %917 = vmatpush1.bf16.msra.mxu0 0
    %918 = vmatprep.subr.bf16.mxu0 0
    %919 = vmatpush1.bf16.msra.mxu0 0
    %920 = vmatprep.subr.bf16.mxu0 0
    %921 = vmatpush1.bf16.msra.mxu0 0
    %922 = vmatprep.subr.bf16.mxu0 0
    %923 = vmatpush1.bf16.msra.mxu0 0
    %924 = vmatprep.subr.bf16.mxu0 0
    %925 = vmatpush1.bf16.msra.mxu0 0
    %926 = vmatprep.subr.bf16.mxu0 0
    %927 = vmatpush1.bf16.msra.mxu0 0
    %928 = vmatprep.subr.bf16.mxu0 0
    %929 = vmatpush1.bf16.msra.mxu0 0
    %930 = vmatprep.mubr.bf16.mxu0 0
    %931 = vmatmul.mubr.bf16.gmra.mrb[0].mxu0 %v896
    %v932 = vpop.f32.mrb[0].mxu0
    %v933 = vadd.f32 0.0, %v932
    %v934 = vpop.f32.mrb[0].mxu0
    %v935 = vadd.f32 0.0, %v934
    %v936 = vpop.f32.mrb[0].mxu0
    %v937 = vadd.f32 0.0, %v936
    %v938 = vpop.f32.mrb[0].mxu0
    %v939 = vadd.f32 0.0, %v938
    %940 = vdwg.mxu0
    %v943 = vunpack.c.l.b16 %v663
    %v944 = vunpack.c.l.b16 %v664
    %v945 = vpack.c.b16 %v944, %v943
    %v947 = vsel %vm690, %v945, 0
    %949 = vmatprep.subr.bf16.mxu0 %v680
    %950 = vmatpush1.bf16.msra.mxu0 %v679
    %951 = vmatprep.subr.bf16.mxu0 0
    %952 = vmatpush1.bf16.msra.mxu0 0
    %953 = vmatprep.subr.bf16.mxu0 0
    %954 = vmatpush1.bf16.msra.mxu0 0
    %955 = vmatprep.subr.bf16.mxu0 0
    %956 = vmatpush1.bf16.msra.mxu0 0
    %957 = vmatprep.subr.bf16.mxu0 0
    %958 = vmatpush1.bf16.msra.mxu0 0
    %959 = vmatprep.subr.bf16.mxu0 0
    %960 = vmatpush1.bf16.msra.mxu0 0
    %961 = vmatprep.subr.bf16.mxu0 0
    %962 = vmatpush1.bf16.msra.mxu0 0
    %963 = vmatprep.subr.bf16.mxu0 0
    %964 = vmatpush1.bf16.msra.mxu0 0
    %965 = vmatprep.subr.bf16.mxu0 0
    %966 = vmatpush1.bf16.msra.mxu0 0
    %967 = vmatprep.subr.bf16.mxu0 0
    %968 = vmatpush1.bf16.msra.mxu0 0
    %969 = vmatprep.subr.bf16.mxu0 0
    %970 = vmatpush1.bf16.msra.mxu0 0
    %971 = vmatprep.subr.bf16.mxu0 0
    %972 = vmatpush1.bf16.msra.mxu0 0
    %973 = vmatprep.subr.bf16.mxu0 0
    %974 = vmatpush1.bf16.msra.mxu0 0
    %975 = vmatprep.subr.bf16.mxu0 0
    %976 = vmatpush1.bf16.msra.mxu0 0
    %977 = vmatprep.subr.bf16.mxu0 0
    %978 = vmatpush1.bf16.msra.mxu0 0
    %979 = vmatprep.subr.bf16.mxu0 0
    %980 = vmatpush1.bf16.msra.mxu0 0
    %981 = vmatprep.mubr.bf16.mxu0 0
    %982 = vmatmul.mubr.bf16.gmra.mrb[0].mxu0 %v947
    %v983 = vpop.f32.mrb[0].mxu0
    %v984 = vadd.f32 0.0, %v983
    %v985 = vpop.f32.mrb[0].mxu0
    %v986 = vadd.f32 0.0, %v985
    %v987 = vpop.f32.mrb[0].mxu0
    %v988 = vadd.f32 0.0, %v987
    %v989 = vpop.f32.mrb[0].mxu0
    %v990 = vadd.f32 0.0, %v989
    %991 = vdwg.mxu0
    %v994 = vunpack.c.l.b16 %v665
    %v995 = vunpack.c.l.b16 %v666
    %v996 = vpack.c.b16 %v995, %v994
    %v998 = vsel %vm690, %v996, 0
    %1000 = vmatprep.subr.bf16.mxu0 %v682
    %1001 = vmatpush1.bf16.msra.mxu0 %v681
    %1002 = vmatprep.subr.bf16.mxu0 0
    %1003 = vmatpush1.bf16.msra.mxu0 0
    %1004 = vmatprep.subr.bf16.mxu0 0
    %1005 = vmatpush1.bf16.msra.mxu0 0
    %1006 = vmatprep.subr.bf16.mxu0 0
    %1007 = vmatpush1.bf16.msra.mxu0 0
    %1008 = vmatprep.subr.bf16.mxu0 0
    %1009 = vmatpush1.bf16.msra.mxu0 0
    %1010 = vmatprep.subr.bf16.mxu0 0
    %1011 = vmatpush1.bf16.msra.mxu0 0
    %1012 = vmatprep.subr.bf16.mxu0 0
    %1013 = vmatpush1.bf16.msra.mxu0 0
    %1014 = vmatprep.subr.bf16.mxu0 0
    %1015 = vmatpush1.bf16.msra.mxu0 0
    %1016 = vmatprep.subr.bf16.mxu0 0
    %1017 = vmatpush1.bf16.msra.mxu0 0
    %1018 = vmatprep.subr.bf16.mxu0 0
    %1019 = vmatpush1.bf16.msra.mxu0 0
    %1020 = vmatprep.subr.bf16.mxu0 0
    %1021 = vmatpush1.bf16.msra.mxu0 0
    %1022 = vmatprep.subr.bf16.mxu0 0
    %1023 = vmatpush1.bf16.msra.mxu0 0
    %1024 = vmatprep.subr.bf16.mxu0 0
    %1025 = vmatpush1.bf16.msra.mxu0 0
    %1026 = vmatprep.subr.bf16.mxu0 0
    %1027 = vmatpush1.bf16.msra.mxu0 0
    %1028 = vmatprep.subr.bf16.mxu0 0
    %1029 = vmatpush1.bf16.msra.mxu0 0
    %1030 = vmatprep.subr.bf16.mxu0 0
    %1031 = vmatpush1.bf16.msra.mxu0 0
    %1032 = vmatprep.mubr.bf16.mxu0 0
    %1033 = vmatmul.mubr.bf16.gmra.mrb[0].mxu0 %v998
    %v1034 = vpop.f32.mrb[0].mxu0
    %v1035 = vadd.f32 0.0, %v1034
    %v1036 = vpop.f32.mrb[0].mxu0
    %v1037 = vadd.f32 0.0, %v1036
    %v1038 = vpop.f32.mrb[0].mxu0
    %v1039 = vadd.f32 0.0, %v1038
    %v1040 = vpop.f32.mrb[0].mxu0
    %v1041 = vadd.f32 0.0, %v1040
    %1042 = vdwg.mxu0
    %v1045 = vunpack.c.l.b16 %v667
    %v1046 = vunpack.c.l.b16 %v668
    %v1047 = vpack.c.b16 %v1046, %v1045
    %v1049 = vsel %vm690, %v1047, 0
    %1051 = vmatprep.subr.bf16.mxu0 %v684
    %1052 = vmatpush1.bf16.msra.mxu0 %v683
    %1053 = vmatprep.subr.bf16.mxu0 0
    %1054 = vmatpush1.bf16.msra.mxu0 0
    %1055 = vmatprep.subr.bf16.mxu0 0
    %1056 = vmatpush1.bf16.msra.mxu0 0
    %1057 = vmatprep.subr.bf16.mxu0 0
    %1058 = vmatpush1.bf16.msra.mxu0 0
    %1059 = vmatprep.subr.bf16.mxu0 0
    %1060 = vmatpush1.bf16.msra.mxu0 0
    %1061 = vmatprep.subr.bf16.mxu0 0
    %1062 = vmatpush1.bf16.msra.mxu0 0
    %1063 = vmatprep.subr.bf16.mxu0 0
    %1064 = vmatpush1.bf16.msra.mxu0 0
    %1065 = vmatprep.subr.bf16.mxu0 0
    %1066 = vmatpush1.bf16.msra.mxu0 0
    %1067 = vmatprep.subr.bf16.mxu0 0
    %1068 = vmatpush1.bf16.msra.mxu0 0
    %1069 = vmatprep.subr.bf16.mxu0 0
    %1070 = vmatpush1.bf16.msra.mxu0 0
    %1071 = vmatprep.subr.bf16.mxu0 0
    %1072 = vmatpush1.bf16.msra.mxu0 0
    %1073 = vmatprep.subr.bf16.mxu0 0
    %1074 = vmatpush1.bf16.msra.mxu0 0
    %1075 = vmatprep.subr.bf16.mxu0 0
    %1076 = vmatpush1.bf16.msra.mxu0 0
    %1077 = vmatprep.subr.bf16.mxu0 0
    %1078 = vmatpush1.bf16.msra.mxu0 0
    %1079 = vmatprep.subr.bf16.mxu0 0
    %1080 = vmatpush1.bf16.msra.mxu0 0
    %1081 = vmatprep.subr.bf16.mxu0 0
    %1082 = vmatpush1.bf16.msra.mxu0 0
    %1083 = vmatprep.mubr.bf16.mxu0 0
    %1084 = vmatmul.mubr.bf16.gmra.mrb[0].mxu0 %v1049
    %v1085 = vpop.f32.mrb[0].mxu0
    %v1086 = vadd.f32 0.0, %v1085
    %v1087 = vpop.f32.mrb[0].mxu0
    %v1088 = vadd.f32 0.0, %v1087
    %v1089 = vpop.f32.mrb[0].mxu0
    %v1090 = vadd.f32 0.0, %v1089
    %v1091 = vpop.f32.mrb[0].mxu0
    %v1092 = vadd.f32 0.0, %v1091
    %1093 = vdwg.mxu0
    %v1094 = vmul.f32 %v621, %v729
    %v1095 = vmul.f32 %v622, %v731
    %v1096 = vmul.f32 %v623, %v733
    %v1097 = vmul.f32 %v624, %v735
    %v1098 = vmul.f32 %v625, %v780
    %v1099 = vmul.f32 %v626, %v782
    %v1100 = vmul.f32 %v627, %v784
    %v1101 = vmul.f32 %v628, %v786
    %v1102 = vmul.f32 %v629, %v831
    %v1103 = vmul.f32 %v630, %v833
    %v1104 = vmul.f32 %v631, %v835
    %v1105 = vmul.f32 %v632, %v837
    %v1106 = vmul.f32 %v633, %v882
    %v1107 = vmul.f32 %v634, %v884
    %v1108 = vmul.f32 %v635, %v886
    %v1109 = vmul.f32 %v636, %v888
    %v1110 = vmul.f32 %v637, %v933
    %v1111 = vmul.f32 %v638, %v935
    %v1112 = vmul.f32 %v639, %v937
    %v1113 = vmul.f32 %v640, %v939
    %v1114 = vmul.f32 %v641, %v984
    %v1115 = vmul.f32 %v642, %v986
    %v1116 = vmul.f32 %v643, %v988
    %v1117 = vmul.f32 %v644, %v990
    %v1118 = vmul.f32 %v645, %v1035
    %v1119 = vmul.f32 %v646, %v1037
    %v1120 = vmul.f32 %v647, %v1039
    %v1121 = vmul.f32 %v648, %v1041
    %v1122 = vmul.f32 %v649, %v1086
    %v1123 = vmul.f32 %v650, %v1088
    %v1124 = vmul.f32 %v651, %v1090
    %v1125 = vmul.f32 %v652, %v1092
    %v1126 = vadd.f32 %v1094, %v1096
    %v1127 = vrot.slane %v1126, 4
    %v1128 = vadd.f32 %v1126, %v1127
    %v1129 = vrot.slane %v1128, 2
    %v1130 = vadd.f32 %v1128, %v1129
    %v1131 = vrot.slane %v1130, 1
    %v1132 = vadd.f32 %v1130, %v1131
    %v1133 = vadd.f32 %v1095, %v1097
    %v1134 = vrot.slane %v1133, 4
    %v1135 = vadd.f32 %v1133, %v1134
    %v1136 = vrot.slane %v1135, 2
    %v1137 = vadd.f32 %v1135, %v1136
    %v1138 = vrot.slane %v1137, 1
    %v1139 = vadd.f32 %v1137, %v1138
    %v1140 = vadd.f32 %v1098, %v1100
    %v1141 = vrot.slane %v1140, 4
    %v1142 = vadd.f32 %v1140, %v1141
    %v1143 = vrot.slane %v1142, 2
    %v1144 = vadd.f32 %v1142, %v1143
    %v1145 = vrot.slane %v1144, 1
    %v1146 = vadd.f32 %v1144, %v1145
    %v1147 = vadd.f32 %v1099, %v1101
    %v1148 = vrot.slane %v1147, 4
    %v1149 = vadd.f32 %v1147, %v1148
    %v1150 = vrot.slane %v1149, 2
    %v1151 = vadd.f32 %v1149, %v1150
    %v1152 = vrot.slane %v1151, 1
    %v1153 = vadd.f32 %v1151, %v1152
    %v1154 = vadd.f32 %v1102, %v1104
    %v1155 = vrot.slane %v1154, 4
    %v1156 = vadd.f32 %v1154, %v1155
    %v1157 = vrot.slane %v1156, 2
    %v1158 = vadd.f32 %v1156, %v1157
    %v1159 = vrot.slane %v1158, 1
    %v1160 = vadd.f32 %v1158, %v1159
    %v1161 = vadd.f32 %v1103, %v1105
    %v1162 = vrot.slane %v1161, 4
    %v1163 = vadd.f32 %v1161, %v1162
    %v1164 = vrot.slane %v1163, 2
    %v1165 = vadd.f32 %v1163, %v1164
    %v1166 = vrot.slane %v1165, 1
    %v1167 = vadd.f32 %v1165, %v1166
    %v1168 = vadd.f32 %v1106, %v1108
    %v1169 = vrot.slane %v1168, 4
    %v1170 = vadd.f32 %v1168, %v1169
    %v1171 = vrot.slane %v1170, 2
    %v1172 = vadd.f32 %v1170, %v1171
    %v1173 = vrot.slane %v1172, 1
    %v1174 = vadd.f32 %v1172, %v1173
    %v1175 = vadd.f32 %v1107, %v1109
    %v1176 = vrot.slane %v1175, 4
    %v1177 = vadd.f32 %v1175, %v1176
    %v1178 = vrot.slane %v1177, 2
    %v1179 = vadd.f32 %v1177, %v1178
    %v1180 = vrot.slane %v1179, 1
    %v1181 = vadd.f32 %v1179, %v1180
    %v1182 = vadd.f32 %v1110, %v1112
    %v1183 = vrot.slane %v1182, 4
    %v1184 = vadd.f32 %v1182, %v1183
    %v1185 = vrot.slane %v1184, 2
    %v1186 = vadd.f32 %v1184, %v1185
    %v1187 = vrot.slane %v1186, 1
    %v1188 = vadd.f32 %v1186, %v1187
    %v1189 = vadd.f32 %v1111, %v1113
    %v1190 = vrot.slane %v1189, 4
    %v1191 = vadd.f32 %v1189, %v1190
    %v1192 = vrot.slane %v1191, 2
    %v1193 = vadd.f32 %v1191, %v1192
    %v1194 = vrot.slane %v1193, 1
    %v1195 = vadd.f32 %v1193, %v1194
    %v1196 = vadd.f32 %v1114, %v1116
    %v1197 = vrot.slane %v1196, 4
    %v1198 = vadd.f32 %v1196, %v1197
    %v1199 = vrot.slane %v1198, 2
    %v1200 = vadd.f32 %v1198, %v1199
    %v1201 = vrot.slane %v1200, 1
    %v1202 = vadd.f32 %v1200, %v1201
    %v1203 = vadd.f32 %v1115, %v1117
    %v1204 = vrot.slane %v1203, 4
    %v1205 = vadd.f32 %v1203, %v1204
    %v1206 = vrot.slane %v1205, 2
    %v1207 = vadd.f32 %v1205, %v1206
    %v1208 = vrot.slane %v1207, 1
    %v1209 = vadd.f32 %v1207, %v1208
    %v1210 = vadd.f32 %v1118, %v1120
    %v1211 = vrot.slane %v1210, 4
    %v1212 = vadd.f32 %v1210, %v1211
    %v1213 = vrot.slane %v1212, 2
    %v1214 = vadd.f32 %v1212, %v1213
    %v1215 = vrot.slane %v1214, 1
    %v1216 = vadd.f32 %v1214, %v1215
    %v1217 = vadd.f32 %v1119, %v1121
    %v1218 = vrot.slane %v1217, 4
    %v1219 = vadd.f32 %v1217, %v1218
    %v1220 = vrot.slane %v1219, 2
    %v1221 = vadd.f32 %v1219, %v1220
    %v1222 = vrot.slane %v1221, 1
    %v1223 = vadd.f32 %v1221, %v1222
    %v1224 = vadd.f32 %v1122, %v1124
    %v1225 = vrot.slane %v1224, 4
    %v1226 = vadd.f32 %v1224, %v1225
    %v1227 = vrot.slane %v1226, 2
    %v1228 = vadd.f32 %v1226, %v1227
    %v1229 = vrot.slane %v1228, 1
    %v1230 = vadd.f32 %v1228, %v1229
    %v1231 = vadd.f32 %v1123, %v1125
    %v1232 = vrot.slane %v1231, 4
    %v1233 = vadd.f32 %v1231, %v1232
    %v1234 = vrot.slane %v1233, 2
    %v1235 = vadd.f32 %v1233, %v1234
    %v1236 = vrot.slane %v1235, 1
    %v1237 = vadd.f32 %v1235, %v1236
    %vm1254 = vcmask 1041409
    %v1255 = vsel %vm1254, %v1146, %v1132
    %vm1256 = vcmask 1042434
    %v1257 = vsel %vm1256, %v1160, %v1255
    %vm1258 = vcmask 1043459
    %v1259 = vsel %vm1258, %v1174, %v1257
    %vm1260 = vcmask 1044484
    %v1261 = vsel %vm1260, %v1188, %v1259
    %vm1262 = vcmask 1045509
    %v1263 = vsel %vm1262, %v1202, %v1261
    %vm1264 = vcmask 1046534
    %v1265 = vsel %vm1264, %v1216, %v1263
    %vm1266 = vcmask 1047559
    %v1267 = vsel %vm1266, %v1230, %v1265
    %v1268 = vsel %vm1254, %v1153, %v1139
    %v1269 = vsel %vm1256, %v1167, %v1268
    %v1270 = vsel %vm1258, %v1181, %v1269
    %v1271 = vsel %vm1260, %v1195, %v1270
    %v1272 = vsel %vm1262, %v1209, %v1271
    %v1273 = vsel %vm1264, %v1223, %v1272
    %v1274 = vsel %vm1266, %v1237, %v1273
    %1277 = vst [vmem:[#allocation8] sm:$0xff] %v1267
    %1278 = vst [vmem:[#allocation8 + $0x8] sm:$0xff] %v1274
    // Predicated region
    $region26: #{tpu_custom_call.1} parent=1 // pred_check
      _
    $region27: #{tpu_custom_call.1} parent=1 // pred_check_branch
      %1280 = sbr.rel (0) target = $region29
    $region28: #{tpu_custom_call.1} parent=1 // pred_region
      %s1282 = ssub.s32 256, 256
      %1283 = vsyncadd [#allocation4], %s1282
      %s1285 = sshll.u32 [#allocation8], 4
      %s1286 = int_to_ptr.vmem [resolvable:$true] %s1285
      %1288 = dma.vmem_to_hbm [thread:$0]  %s1286, 256, %s3, [#allocation4]
    $region29: #{tpu_custom_call.1} parent=1 // pred_fallthru
      _
    // Predicated region
    $region30: #{tpu_custom_call.1} parent=1 // pred_check
      _
    $region31: #{tpu_custom_call.1} parent=1 // pred_check_branch
      %1290 = sbr.rel (0) target = $region33
    $region32: #{tpu_custom_call.1} parent=1 // pred_region
      %1291 = dma.done [#allocation4], 256
    $region33: #{tpu_custom_call.1} parent=1 // pred_fallthru
      _
    %1292 = vsyncpa [#allocation3], 1
    %1293 = vsyncpa [#allocation6], 1
    %1294 = vsyncpa [#allocation4], 1

</llo_original>
